<compile_context>
chip_gen: v5e
topology: v5e:2x2
jax: 0.10.0
libtpu: 0.0.40
codegen_flags: <defaults>
</compile_context>

<pallas_src>
import jax
import jax.numpy as jnp
from jax.experimental import pallas as pl
from jax.experimental.pallas import tpu as pltpu


def _fused_kernel(x_ref, w_ref, b_ref, o_ref):
    # x_ref: (tb, O*F) input dtype; w_ref: (O*F, E_pad) bf16 (pre-scaled by 1/O);
    # b_ref: (1, E_pad) f32; o_ref: (tb, E_pad).
    xb = x_ref[...].astype(jnp.bfloat16)              # in-register cast, hidden under DMA
    emb = jax.lax.dot_general(
        xb, w_ref[...],
        dimension_numbers=(((1,), (0,)), ((), ())),
        preferred_element_type=jnp.float32)           # object-sum lives in the MXU f32 acc
    o_ref[...] = (emb + b_ref[...]).astype(o_ref.dtype)


def _reduce_kernel(x_ref, w_ref, b_ref, o_ref):
    # Fallback for very large O*F.  x_ref: (tb, O, F) input dtype;
    # w_ref: (F, E_pad) bf16 pre-scaled by 1/O; b_ref: (1, E_pad) f32.
    xs = jnp.sum(x_ref[...], axis=1)                  # (tb, F) in the input dtype
    emb = jax.lax.dot_general(
        xs.astype(jnp.bfloat16), w_ref[...],
        dimension_numbers=(((1,), (0,)), ((), ())),
        preferred_element_type=jnp.float32)
    o_ref[...] = (emb + b_ref[...]).astype(o_ref.dtype)


def _tpu_info():
    """(vmem_capacity_bytes, tensorcores_per_chip) with conservative defaults."""
    vmem_cap = 64 * 1024 * 1024      # v7x-sized default: safe on every generation
    n_cores = 1                      # default: no dual-TC split (safe on v5e/v6e)
    try:
        info = pltpu.get_tpu_info()
        vmem_cap = int(getattr(info, "vmem_capacity_bytes", vmem_cap))
        for name in ("tensorcores_per_chip", "num_tensorcores",
                     "cores_per_chip", "num_cores"):
            val = getattr(info, name, None)
            if isinstance(val, int) and val > 0:
                n_cores = val
                break
    except Exception:
        pass
    return vmem_cap, n_cores


def _plan_tiles(n, x_row_bytes, out_row_bytes, resident_bytes):
    """Pick the batch tile (tb) and a consistent vmem_limit_bytes."""
    vmem_cap, n_cores = _tpu_info()
    # ~3/4 of physical VMEM: 96 MiB on v5e/v6e (128 MiB), 48 MiB on v7x (64 MiB).
    vmem_limit = min(int(vmem_cap * 3 // 4), 96 * 1024 * 1024)
    # Per-row VMEM: double-buffered x block + double-buffered output block.
    per_row = 2 * x_row_bytes + 2 * out_row_bytes
    budget = max(vmem_limit - resident_bytes - (4 << 20), per_row * 8)
    tb_cap = max(8, (budget // per_row) // 8 * 8)
    # Target ~4 MiB per x block (mem-bound kernels reach ~85% of HBM roofline
    # only with >=512-row / multi-MiB tiles), capped by the VMEM budget.
    target = max(512, (4 << 20) // max(x_row_bytes, 1))
    tb = min(max(8, (target // 8) * 8), tb_cap)
    if n <= tb:
        if n_cores >= 2 and n >= 16:
            # Two parallel grid steps so both v7x TensorCores get work.
            half = -(-n // 2)
            tb = ((half + 7) // 8) * 8
        else:
            tb = n           # single step on single-TC chips: no per-step overhead
    # Keep the compiler limit consistent with what we actually allocate.
    need = resident_bytes + per_row * tb + (2 << 20)
    vmem_limit = min(max(vmem_limit, need), vmem_cap)
    return tb, int(vmem_limit)


def deepset_forward(instances, weight, bias, *, fuse_threshold=4096):
    """DeepSet forward: mean over objects of a linear embedding.

    instances: (N, O, F); weight: (E, F) as in nn.Linear; bias: (E,) -> (N, E).
    """
    if instances.ndim != 3:
        raise ValueError("expected instances of shape (N, O, F)")
    N, O, F = instances.shape
    E = weight.shape[0]
    out_dtype = instances.dtype
    E_pad = -(-E // 128) * 128                 # lane-dense output width
    K = O * F
    x_itemsize = jnp.dtype(instances.dtype).itemsize

    # Lane-dense padded bias (tiny host-side array; padded lanes are zero).
    b2 = jnp.zeros((1, E_pad), jnp.float32).at[0, :E].set(bias.astype(jnp.float32))

    use_fused = K <= fuse_threshold
    if use_fused:
        # W_big[o*F + f, e] = W[e, f] / O  -> object-mean fused into the matmul.
        w_in = jnp.tile(weight.T.astype(jnp.float32) / O, (O, 1)).astype(jnp.bfloat16)
        w_in = jnp.pad(w_in, ((0, 0), (0, E_pad - E)))          # (K, E_pad)
        x_in = instances.reshape(N, K)                           # free contiguous reshape
        resident = 2 * (K * E_pad * 2) + 2 * (E_pad * 4)         # dbl-buffered W + b
        tb, vmem_limit = _plan_tiles(N, K * x_itemsize, E_pad * 4, resident)
        kernel = _fused_kernel
        x_spec = pl.BlockSpec((tb, K), lambda n: (n, 0))
        w_spec = pl.BlockSpec((K, E_pad), lambda n: (0, 0))      # resident weight
    else:
        # TODO(synk): for huge O*F a lane-packed flat layout for the in-kernel
        # object-sum would recover more bandwidth; kept simple for the fallback.
        w_in = (weight.T.astype(jnp.float32) / O).astype(jnp.bfloat16)   # (F, E)
        w_in = jnp.pad(w_in, ((0, 0), (0, E_pad - E)))           # (F, E_pad)
        x_in = instances
        resident = 2 * (F * E_pad * 2) + 2 * (E_pad * 4)
        tb, vmem_limit = _plan_tiles(N, K * x_itemsize, E_pad * 4, resident)
        kernel = _reduce_kernel
        x_spec = pl.BlockSpec((tb, O, F), lambda n: (n, 0, 0))
        w_spec = pl.BlockSpec((F, E_pad), lambda n: (0, 0))

    out = pl.pallas_call(
        kernel,
        out_shape=jax.ShapeDtypeStruct((N, E_pad), out_dtype),
        grid_spec=pltpu.PrefetchScalarGridSpec(
            num_scalar_prefetch=0,
            grid=(pl.cdiv(N, tb),),
            in_specs=[
                x_spec,
                w_spec,
                pl.BlockSpec((1, E_pad), lambda n: (0, 0)),      # resident bias
            ],
            out_specs=pl.BlockSpec((tb, E_pad), lambda n: (n, 0)),
        ),
        compiler_params=pltpu.CompilerParams(
            dimension_semantics=("parallel",),
            vmem_limit_bytes=vmem_limit,
        ),
    )(x_in, w_in, b2)
    return out[:, :E] if E_pad != E else out


if __name__ == "__main__":
    # Small shapes consistent with the module: N sets of O objects, F features each.
    N, O, F, E = 2, 8, 16, 32
    key = jax.random.PRNGKey(0)
    kx, kw, kb = jax.random.split(key, 3)

    instances = jax.random.normal(kx, (N, O, F), dtype=jnp.float32)
    # Deterministic "nn.Linear(n_features, embedding_size)" parameters.
    bound = 1.0 / (F ** 0.5)
    weight = jax.random.uniform(kw, (E, F), minval=-bound, maxval=bound,
                                dtype=jnp.float32)   # (out, in) like nn.Linear
    bias = jax.random.uniform(kb, (E,), minval=-bound, maxval=bound,
                              dtype=jnp.float32)

    out = deepset_forward(instances, weight, bias)
    out = jax.block_until_ready(out)

    # Pure-JAX f32 reference of the forward semantics; tolerance covers the
    # bf16 MXU-input rounding (the object-sum accumulates in f32 on the MXU).
    ref = jnp.mean(instances @ weight.T + bias, axis=1)
    assert out.shape == (N, E)
    assert jnp.allclose(out, ref, atol=3e-2, rtol=3e-2), float(jnp.max(jnp.abs(out - ref)))
    print("KERNEL_OK")
</pallas_src>

<mosaic_0001>
module attributes {stable_mosaic.version = 11 : i64} {
  func.func @_fused_kernel(%arg0: i32, %arg1: memref<2x128xf32, #tpu.memory_space<vmem>>, %arg2: memref<128x128xbf16, #tpu.memory_space<vmem>>, %arg3: memref<1x128xf32, #tpu.memory_space<vmem>>, %arg4: memref<2x128xf32, #tpu.memory_space<vmem>>) attributes {dimension_semantics = [#tpu.dimension_semantics<parallel>], iteration_bounds = array<i64: 1>, scalar_prefetch = 0 : i64, scratch_operands = 0 : i64, tpu.core_type = #tpu.core_type<tc>, window_params = [{transform_indices = @transform_0, window_bounds = array<i64: 2, 128>}, {pipeline_mode = #tpu.pipeline_mode<synchronous>, transform_indices = @transform_1, window_bounds = array<i64: 128, 128>}, {pipeline_mode = #tpu.pipeline_mode<synchronous>, transform_indices = @transform_2, window_bounds = array<i64: 1, 128>}, {transform_indices = @transform_3, window_bounds = array<i64: 2, 128>}]} {
    %c0 = arith.constant 0 : index
    %c0_0 = arith.constant 0 : index
    %0 = vector.load %arg1[%c0, %c0_0] : memref<2x128xf32, #tpu.memory_space<vmem>>, vector<2x128xf32>
    %1 = arith.truncf %0 : vector<2x128xf32> to vector<2x128xbf16>
    %c0_1 = arith.constant 0 : index
    %c0_2 = arith.constant 0 : index
    %2 = vector.load %arg2[%c0_1, %c0_2] : memref<128x128xbf16, #tpu.memory_space<vmem>>, vector<128x128xbf16>
    %cst = arith.constant dense<0.000000e+00> : vector<2x128xf32>
    %3 = tpu.matmul %1, %2, %cst {dimension_numbers = #tpu.dot_dimension_numbers<[1], [0], [0], [1], [0, 0, 1, 1], [], []>} : vector<2x128xbf16>, vector<128x128xbf16>, vector<2x128xf32> -> vector<2x128xf32>
    %c0_3 = arith.constant 0 : index
    %c0_4 = arith.constant 0 : index
    %4 = vector.load %arg3[%c0_3, %c0_4] : memref<1x128xf32, #tpu.memory_space<vmem>>, vector<1x128xf32>
    %5 = vector.broadcast %4 : vector<1x128xf32> to vector<2x128xf32>
    %6 = arith.addf %3, %5 : vector<2x128xf32>
    %c0_5 = arith.constant 0 : index
    %c0_6 = arith.constant 0 : index
    %7 = vector.load %arg4[%c0_5, %c0_6] : memref<2x128xf32, #tpu.memory_space<vmem>>, vector<2x128xf32>
    tpu.vector_store %arg4[%c0_5, %c0_6], %6 {strides = array<i32>} : memref<2x128xf32, #tpu.memory_space<vmem>>, vector<2x128xf32>,
    return
  }
  func.func @transform_0(%arg0: i32) -> (i32, i32) {
    %c0_i32 = arith.constant 0 : i32
    %c0_i32_0 = arith.constant 0 : i32
    return %arg0, %c0_i32 : i32, i32
  }
  func.func @transform_1(%arg0: i32) -> (i32, i32) {
    %c0_i32 = arith.constant 0 : i32
    %c0_i32_0 = arith.constant 0 : i32
    %c0_i32_1 = arith.constant 0 : i32
    return %c0_i32, %c0_i32_0 : i32, i32
  }
  func.func @transform_2(%arg0: i32) -> (i32, i32) {
    %c0_i32 = arith.constant 0 : i32
    %c0_i32_0 = arith.constant 0 : i32
    %c0_i32_1 = arith.constant 0 : i32
    return %c0_i32, %c0_i32_0 : i32, i32
  }
  func.func @transform_3(%arg0: i32) -> (i32, i32) {
    %c0_i32 = arith.constant 0 : i32
    %c0_i32_0 = arith.constant 0 : i32
    return %arg0, %c0_i32 : i32, i32
  }
}

</mosaic_0001>

<llo_original>
// kernel: tpu_custom_call.1
$region0: #{tpu_custom_call.1}
  #allocation0 [shape = 'u32[]', space=smem, size = 0x4, offset = 0x4, fixed_abs, tag = 'smem constant byte address 0x4 - core index']
  #allocation1 [shape = 'u32[72,128]{1,0:T(1,128)}', space=vmem, size = 0x9000, scoped, tag = 'internal scratch']
  %s0 = inlined_call_operand.hbm [shape: f32[2,128], index: 0, kind: input, shape index: {}]
  %s1 = inlined_call_operand.hbm [shape: bf16[128,128], index: 1, kind: input, shape index: {}]
  %s2 = inlined_call_operand.vmem [shape: f32[1,128], index: 2, kind: input, shape index: {}]
  %s3 = inlined_call_operand.hbm [shape: f32[2,128], index: 3, kind: output, shape index: {}]
  %s4 = sld [smem:[#allocation0]]
  $region30: #{tpu_custom_call.1} parent=0
    _
  %s6 = ssub.s32 1, %s4
  %s7 = scalar_select 0, %s6, %s4
  $region1: #{tpu_custom_call.1} parent=0
    #allocation2 [shape = 'u8[1024]{0}', space=vmem, size = 0x400, scoped, tag = 'input window, operand 0, single buffered']
    #allocation3 [shape = 's32[1]{0}', space=sflag, size = 0x4, scoped, tag = 'scoped memory for tpu_custom_call.1']
    #allocation4 [shape = 's32[1]{0}', space=sflag, size = 0x4, scoped, tag = 'scoped memory for tpu_custom_call.1']
    #allocation5 [shape = 'u8[32768]{0}', space=vmem, size = 0x8000, scoped, tag = 'input window, operand 1, single buffered']
    #allocation6 [shape = 's32[1]{0}', space=sflag, size = 0x4, scoped, tag = 'scoped memory for tpu_custom_call.1']
    #allocation7 [shape = 'u8[1024]{0}', space=vmem, size = 0x400, scoped, tag = 'output window, operand 0, single buffered']
    %8 = vsyncpa [#allocation3], 0
    %9 = vsyncpa [#allocation6], 0
    %10 = vsyncpa [#allocation4], 0
    // Predicated region
    $region2: #{tpu_custom_call.1} parent=1 // pred_check
      _
    $region3: #{tpu_custom_call.1} parent=1 // pred_check_branch
      %12 = sbr.rel (0) target = $region5
    $region4: #{tpu_custom_call.1} parent=1 // pred_region
      %14 = vsyncadd [#allocation3], 0
      %s16 = sshll.u32 %s0, 4
      %s17 = int_to_ptr.hbm [resolvable:$true] %s16
      %s18 = sshll.u32 [#allocation2], 4
      %s19 = int_to_ptr.vmem [resolvable:$true] %s18
      %21 = dma.hbm_to_vmem [thread:$0]  %s17, 32, %s19, [#allocation3]
    $region5: #{tpu_custom_call.1} parent=1 // pred_fallthru
      _
    // Predicated region
    $region6: #{tpu_custom_call.1} parent=1 // pred_check
      _
    $region7: #{tpu_custom_call.1} parent=1 // pred_check_branch
      %23 = sbr.rel (0) target = $region9
    $region8: #{tpu_custom_call.1} parent=1 // pred_region
      %25 = vsyncadd [#allocation6], 0
      %s26 = sshll.u32 %s1, 4
      %s27 = int_to_ptr.hbm [resolvable:$true] %s26
      %s28 = sshll.u32 [#allocation5], 4
      %s29 = int_to_ptr.vmem [resolvable:$true] %s28
      %34 = dma.hbm_to_vmem [thread:$0]  %s27, 1024, %s29, [#allocation6], 64, 64, 4
    $region9: #{tpu_custom_call.1} parent=1 // pred_fallthru
      _
    // Predicated region
    $region10: #{tpu_custom_call.1} parent=1 // pred_check
      _
    $region11: #{tpu_custom_call.1} parent=1 // pred_check_branch
      %36 = sbr.rel (0) target = $region13
    $region12: #{tpu_custom_call.1} parent=1 // pred_region
      _
    $region13: #{tpu_custom_call.1} parent=1 // pred_fallthru
      _
    // Predicated region
    $region14: #{tpu_custom_call.1} parent=1 // pred_check
      _
    $region15: #{tpu_custom_call.1} parent=1 // pred_check_branch
      %38 = sbr.rel (0) target = $region17
    $region16: #{tpu_custom_call.1} parent=1 // pred_region
      %40 = dma.done [#allocation3], 32
    $region17: #{tpu_custom_call.1} parent=1 // pred_fallthru
      _
    // Predicated region
    $region18: #{tpu_custom_call.1} parent=1 // pred_check
      _
    $region19: #{tpu_custom_call.1} parent=1 // pred_check_branch
      %42 = sbr.rel (0) target = $region21
    $region20: #{tpu_custom_call.1} parent=1 // pred_region
      %44 = dma.done [#allocation6], 1024
    $region21: #{tpu_custom_call.1} parent=1 // pred_fallthru
      _
    %v45 = vld [vmem:[#allocation2] sm:$0x3]
    %v46 = vpack.c.bf16 %v45, %v45
    %v47 = vld [vmem:[#allocation5] sm:$0xf]
    %v48 = vld [vmem:[#allocation5 + $0x4] sm:$0xf]
    %v49 = vld [vmem:[#allocation5 + $0x8] sm:$0xf]
    %v50 = vld [vmem:[#allocation5 + $0xc] sm:$0xf]
    %v51 = vld [vmem:[#allocation5 + $0x10] sm:$0xf]
    %v52 = vld [vmem:[#allocation5 + $0x14] sm:$0xf]
    %v53 = vld [vmem:[#allocation5 + $0x18] sm:$0xf]
    %v54 = vld [vmem:[#allocation5 + $0x1c] sm:$0xf]
    %v55 = vld [vmem:[#allocation5 + $0x20] sm:$0xf]
    %v56 = vld [vmem:[#allocation5 + $0x24] sm:$0xf]
    %v57 = vld [vmem:[#allocation5 + $0x28] sm:$0xf]
    %v58 = vld [vmem:[#allocation5 + $0x2c] sm:$0xf]
    %v59 = vld [vmem:[#allocation5 + $0x30] sm:$0xf]
    %v60 = vld [vmem:[#allocation5 + $0x34] sm:$0xf]
    %v61 = vld [vmem:[#allocation5 + $0x38] sm:$0xf]
    %v62 = vld [vmem:[#allocation5 + $0x3c] sm:$0xf]
    %v63 = vld [vmem:[%s2] sm:$0x1]
    %v65 = vperm.slane %v63, 0
    %v83 = vunpack.c.l.b16 %v47
    %v84 = vunpack.c.l.b16 %v48
    %v85 = vunpack.c.l.b16 %v49
    %v86 = vunpack.c.l.b16 %v50
    %v87 = vunpack.c.l.b16 %v51
    %v88 = vunpack.c.l.b16 %v52
    %v89 = vunpack.c.l.b16 %v53
    %v90 = vunpack.c.l.b16 %v54
    %v91 = vunpack.c.l.b16 %v55
    %v92 = vunpack.c.l.b16 %v56
    %v93 = vunpack.c.l.b16 %v57
    %v94 = vunpack.c.l.b16 %v58
    %v95 = vunpack.c.l.b16 %v59
    %v96 = vunpack.c.l.b16 %v60
    %v97 = vunpack.c.l.b16 %v61
    %v98 = vunpack.c.l.b16 %v62
    %v99 = vpack.c.b16 %v84, %v83
    %v100 = vpack.c.b16 %v86, %v85
    %v101 = vpack.c.b16 %v88, %v87
    %v102 = vpack.c.b16 %v90, %v89
    %v103 = vpack.c.b16 %v92, %v91
    %v104 = vpack.c.b16 %v94, %v93
    %v105 = vpack.c.b16 %v96, %v95
    %v106 = vpack.c.b16 %v98, %v97
    %115 = vmatpush.bf16.msra.mxu0 %v106
    %116 = vmatpush.bf16.msra.mxu0 %v105
    %117 = vmatpush.bf16.msra.mxu0 %v104
    %118 = vmatpush.bf16.msra.mxu0 %v103
    %119 = vmatpush.bf16.msra.mxu0 %v102
    %120 = vmatpush.bf16.msra.mxu0 %v101
    %121 = vmatpush.bf16.msra.mxu0 %v100
    %122 = vmatpush.bf16.msra.mxu0 %v99
    %123 = vmatmul.bf16.gmra.mxu0 %v46
    %v124 = vpop.f32.mrf.mxu0
    %v125 = vadd.f32 %v65, %v124
    %v126 = vpop.f32.mrf.mxu0
    %127 = vdwg.mxu0
    %128 = vst [vmem:[#allocation7] sm:$0x3] %v125
    // Predicated region
    $region22: #{tpu_custom_call.1} parent=1 // pred_check
      _
    $region23: #{tpu_custom_call.1} parent=1 // pred_check_branch
      %130 = sbr.rel (0) target = $region25
    $region24: #{tpu_custom_call.1} parent=1 // pred_region
      %132 = vsyncadd [#allocation4], 0
      %s134 = sshll.u32 [#allocation7], 4
      %s135 = int_to_ptr.vmem [resolvable:$true] %s134
      %s136 = sshll.u32 %s3, 4
      %s137 = int_to_ptr.hbm [resolvable:$true] %s136
      %139 = dma.vmem_to_hbm [thread:$0]  %s135, 32, %s137, [#allocation4]
    $region25: #{tpu_custom_call.1} parent=1 // pred_fallthru
      _
    // Predicated region
    $region26: #{tpu_custom_call.1} parent=1 // pred_check
      _
    $region27: #{tpu_custom_call.1} parent=1 // pred_check_branch
      %141 = sbr.rel (0) target = $region29
    $region28: #{tpu_custom_call.1} parent=1 // pred_region
      %143 = dma.done [#allocation4], 32
    $region29: #{tpu_custom_call.1} parent=1 // pred_fallthru
      _
    %144 = vsyncpa [#allocation3], 1
    %145 = vsyncpa [#allocation6], 1
    %146 = vsyncpa [#allocation4], 1

</llo_original>
